<compile_context>
chip_gen: v5e
topology: v5e:2x2
jax: 0.10.0
libtpu: 0.0.40
codegen_flags: <defaults>
</compile_context>

<pallas_src>
import functools
import numpy as np
import jax
import jax.numpy as jnp
from jax import lax
from jax.experimental import pallas as pl
from jax.experimental.pallas import tpu as pltpu


# ------------------------------ Pallas kernel --------------------------------

def fast_encoder_kernel(x_ref, w1_ref, b1_ref, w2_ref, b2_ref,
                        w3s_ref, b3s_ref, w4bd_ref, b4s_ref, gram_ref,
                        *, num_types, h2):
    """Fused FastEncoder forward for ONE batch element (grid axis = batch).

    x_ref    : [N, T]                   node features of this batch element
    w1/b1    : [T, H0], [1, H0]
    w2/b2    : [H0, H1], [1, H1]
    w3s/b3s  : [H1, F*H2], [1, F*H2]    all F 'spec_fc' layers stacked
    w4bd/b4s : [F*H2, F*H2], [1, F*H2]  all F 'out_fc' layers, block-diagonal
    gram_ref : [F, N, N]                per-type per-batch Gram ('dot' logits)
    """
    x = x_ref[...]

    # Shared node MLP (dropout == identity in inference mode).
    h = jnp.dot(x, w1_ref[...], preferred_element_type=jnp.float32) + b1_ref[...]
    h = jnp.maximum(h, 0.0)
    h = jnp.dot(h, w2_ref[...], preferred_element_type=jnp.float32) + b2_ref[...]
    h = jnp.maximum(h, 0.0)

    # All F edge-type transforms in two dense 2-D matmuls (F*H2 = 48 is a
    # single MXU tile, so the block-diagonal FLOP overhead is free here).
    z = jnp.dot(h, w3s_ref[...], preferred_element_type=jnp.float32) + b3s_ref[...]
    z = jnp.maximum(z, 0.0)
    xe = jnp.dot(z, w4bd_ref[...], preferred_element_type=jnp.float32) + b4s_ref[...]

    # 'dot' distance: per-type Gram matrix over this batch's N nodes only.
    # For the fully-connected adjacency the N x N Gram is exactly the needed
    # work (E ~= N^2).  F is tiny and static -> fully unrolled at trace time.
    for f in range(num_types):
        xe_f = xe[:, f * h2:(f + 1) * h2]
        gram_ref[f] = lax.dot_general(
            xe_f, xe_f, (((1,), (1,)), ((), ())),
            preferred_element_type=jnp.float32)


# -------------------------- One-time weight packing ---------------------------

def pack_params(params):
    """Repack per-type weights once (trace/init time, not per forward call)."""
    W1, b1, W2, b2, W3, b3, W4, b4 = params
    F_types, H1, H2 = W3.shape
    W3s = jnp.transpose(W3, (1, 0, 2)).reshape(H1, F_types * H2)
    b3s = b3.reshape(1, F_types * H2)
    W4bd = jax.scipy.linalg.block_diag(*[W4[i] for i in range(F_types)])
    b4s = b4.reshape(1, F_types * H2)
    return (W1, b1, W2, b2, W3s, b3s, W4bd, b4s, F_types, H2)


# -------------------------------- Wrapper -------------------------------------

def fast_encoder_forward(x, packed, row, col):
    """x: [B, N, T] float32; row/col: int32 [E]. Returns [B, E, F] float32."""
    W1, b1, W2, b2, W3s, b3s, W4bd, b4s, F_types, H2 = packed
    B, N, T = x.shape
    H0 = W1.shape[1]
    H1 = W2.shape[1]
    FH = F_types * H2

    const2 = lambda b: (0, 0)  # weights: same block every grid step -> resident

    flops = (2 * B * N * (T * H0 + H0 * H1 + H1 * FH + FH * FH)
             + 2 * B * F_types * N * N * H2)
    bytes_accessed = 4 * (B * N * T
                          + T * H0 + H0 + H0 * H1 + H1
                          + H1 * FH + FH + FH * FH + FH
                          + B * F_types * N * N)

    gram = pl.pallas_call(
        functools.partial(fast_encoder_kernel, num_types=F_types, h2=H2),
        out_shape=jax.ShapeDtypeStruct((B, F_types, N, N), jnp.float32),
        grid_spec=pltpu.PrefetchScalarGridSpec(
            num_scalar_prefetch=0,
            grid=(B,),
            in_specs=[
                # one batch element per grid step (batch dim squeezed away)
                pl.BlockSpec((None, N, T), lambda b: (b, 0, 0)),
                pl.BlockSpec((T, H0), const2),
                pl.BlockSpec((1, H0), const2),
                pl.BlockSpec((H0, H1), const2),
                pl.BlockSpec((1, H1), const2),
                pl.BlockSpec((H1, FH), const2),
                pl.BlockSpec((1, FH), const2),
                pl.BlockSpec((FH, FH), const2),
                pl.BlockSpec((1, FH), const2),
            ],
            out_specs=pl.BlockSpec((None, F_types, N, N),
                                   lambda b: (b, 0, 0, 0)),
        ),
        compiler_params=pltpu.CompilerParams(
            # batch axis is independent -> shard across v7x's 2 TensorCores
            dimension_semantics=("parallel",),
            vmem_limit_bytes=32 * 1024 * 1024),
        cost_estimate=pl.CostEstimate(flops=flops, transcendentals=0,
                                      bytes_accessed=bytes_accessed),
    )(x, W1, b1, W2, b2, W3s, b3s, W4bd, b4s)

    # Sparse-adjacency gather (cheap glue, B*E*F elements of B*F*N*N):
    # logits[b, e, f] = gram[b, f, row[e], col[e]]
    logits = gram[:, :, row, col]                 # [B, F, E]
    return jnp.transpose(logits, (0, 2, 1))       # [B, E, F]


# ----------------------------- Parameter init ---------------------------------

def xavier_normal(key, shape):
    fan_in, fan_out = shape[-2], shape[-1]
    std = np.sqrt(2.0 / (fan_in + fan_out))
    return jax.random.normal(key, shape, dtype=jnp.float32) * std


def init_params(key, n_in, n_hid, n_out):
    H0, H1, H2 = n_hid
    k = jax.random.split(key, 4)
    W1 = xavier_normal(k[0], (n_in, H0))
    b1 = jnp.full((1, H0), 0.1, dtype=jnp.float32)
    W2 = xavier_normal(k[1], (H0, H1))
    b2 = jnp.full((1, H1), 0.1, dtype=jnp.float32)
    W3 = xavier_normal(k[2], (n_out, H1, H2))
    b3 = jnp.full((n_out, H2), 0.1, dtype=jnp.float32)
    W4 = xavier_normal(k[3], (n_out, H2, H2))
    b4 = jnp.full((n_out, H2), 0.1, dtype=jnp.float32)
    return (W1, b1, W2, b2, W3, b3, W4, b4)


# ----------------------------- Pure-JAX reference ------------------------------

def reference_forward(x, params, row, col):
    W1, b1, W2, b2, W3, b3, W4, b4 = params
    h = jnp.maximum(x @ W1 + b1, 0.0)
    h = jnp.maximum(h @ W2 + b2, 0.0)
    outs = []
    for i in range(W3.shape[0]):
        z = jnp.maximum(h @ W3[i] + b3[i], 0.0)
        xe = z @ W4[i] + b4[i]
        esrc = xe[:, row, :]
        edst = xe[:, col, :]
        outs.append((esrc * edst).sum(-1))   # 'dot' distance
    return jnp.stack(outs, axis=-1)


# ----------------------------------- Main --------------------------------------

if __name__ == "__main__":
    B, N, T = 2, 8, 16            # batch, nodes, time-steps (n_in = T)
    n_hid = [32, 32, 16]          # [H0, H1, H2]
    n_out = 3                     # number of edge types (F)

    key = jax.random.PRNGKey(0)
    kx, kp = jax.random.split(key)
    x = jax.random.normal(kx, (B, N, T), dtype=jnp.float32)
    params = init_params(kp, T, n_hid, n_out)
    packed = pack_params(params)          # one-time weight repacking

    # Fully-connected graph without self-loops (adj = ones(N,N) - eye(N)).
    rr, cc = np.meshgrid(np.arange(N), np.arange(N), indexing='ij')
    mask = rr != cc
    row = jnp.asarray(rr[mask], dtype=jnp.int32)   # [E], E = N*(N-1)
    col = jnp.asarray(cc[mask], dtype=jnp.int32)

    out = fast_encoder_forward(x, packed, row, col)
    out = jax.block_until_ready(out)

    ref = jax.block_until_ready(reference_forward(x, params, row, col))
    assert out.shape == (B, N * (N - 1), n_out), out.shape
    np.testing.assert_allclose(np.asarray(out), np.asarray(ref),
                               rtol=1e-5, atol=1e-5)
    print("KERNEL_OK")
</pallas_src>

<mosaic_0001>
module attributes {stable_mosaic.version = 11 : i64} {
  func.func @fast_encoder_kernel(%arg0: i32, %arg1: memref<1x8x16xf32, #tpu.memory_space<vmem>>, %arg2: memref<16x32xf32, #tpu.memory_space<vmem>>, %arg3: memref<1x32xf32, #tpu.memory_space<vmem>>, %arg4: memref<32x32xf32, #tpu.memory_space<vmem>>, %arg5: memref<1x32xf32, #tpu.memory_space<vmem>>, %arg6: memref<32x48xf32, #tpu.memory_space<vmem>>, %arg7: memref<1x48xf32, #tpu.memory_space<vmem>>, %arg8: memref<48x48xf32, #tpu.memory_space<vmem>>, %arg9: memref<1x48xf32, #tpu.memory_space<vmem>>, %arg10: memref<1x3x8x8xf32, #tpu.memory_space<vmem>>) attributes {dimension_semantics = [#tpu.dimension_semantics<parallel>], iteration_bounds = array<i64: 2>, scalar_prefetch = 0 : i64, scratch_operands = 0 : i64, tpu.core_type = #tpu.core_type<tc>, window_params = [{transform_indices = @transform_0, window_bounds = array<i64: 1, 8, 16>}, {pipeline_mode = #tpu.pipeline_mode<synchronous>, transform_indices = @transform_1, window_bounds = array<i64: 16, 32>}, {pipeline_mode = #tpu.pipeline_mode<synchronous>, transform_indices = @transform_2, window_bounds = array<i64: 1, 32>}, {pipeline_mode = #tpu.pipeline_mode<synchronous>, transform_indices = @transform_3, window_bounds = array<i64: 32, 32>}, {pipeline_mode = #tpu.pipeline_mode<synchronous>, transform_indices = @transform_4, window_bounds = array<i64: 1, 32>}, {pipeline_mode = #tpu.pipeline_mode<synchronous>, transform_indices = @transform_5, window_bounds = array<i64: 32, 48>}, {pipeline_mode = #tpu.pipeline_mode<synchronous>, transform_indices = @transform_6, window_bounds = array<i64: 1, 48>}, {pipeline_mode = #tpu.pipeline_mode<synchronous>, transform_indices = @transform_7, window_bounds = array<i64: 48, 48>}, {pipeline_mode = #tpu.pipeline_mode<synchronous>, transform_indices = @transform_8, window_bounds = array<i64: 1, 48>}, {transform_indices = @transform_9, window_bounds = array<i64: 1, 3, 8, 8>}]} {
    %c0 = arith.constant 0 : index
    %c0_0 = arith.constant 0 : index
    %c0_1 = arith.constant 0 : index
    %0 = vector.load %arg1[%c0, %c0_0, %c0_1] : memref<1x8x16xf32, #tpu.memory_space<vmem>>, vector<1x8x16xf32>
    %1 = vector.shape_cast %0 : vector<1x8x16xf32> to vector<8x16xf32>
    %c0_2 = arith.constant 0 : index
    %c0_3 = arith.constant 0 : index
    %2 = vector.load %arg2[%c0_2, %c0_3] : memref<16x32xf32, #tpu.memory_space<vmem>>, vector<16x32xf32>
    %cst = arith.constant dense<0.000000e+00> : vector<8x32xf32>
    %3 = tpu.matmul %1, %2, %cst {dimension_numbers = #tpu.dot_dimension_numbers<[1], [0], [0], [1], [0, 0, 1, 1], [], []>} : vector<8x16xf32>, vector<16x32xf32>, vector<8x32xf32> -> vector<8x32xf32>
    %c0_4 = arith.constant 0 : index
    %c0_5 = arith.constant 0 : index
    %4 = vector.load %arg3[%c0_4, %c0_5] : memref<1x32xf32, #tpu.memory_space<vmem>>, vector<1x32xf32>
    %5 = vector.broadcast %4 : vector<1x32xf32> to vector<8x32xf32>
    %6 = arith.addf %3, %5 : vector<8x32xf32>
    %cst_6 = arith.constant 0.000000e+00 : f32
    %7 = vector.broadcast %cst_6 : f32 to vector<8x32xf32>
    %8 = arith.maximumf %6, %7 : vector<8x32xf32>
    %c0_7 = arith.constant 0 : index
    %c0_8 = arith.constant 0 : index
    %9 = vector.load %arg4[%c0_7, %c0_8] : memref<32x32xf32, #tpu.memory_space<vmem>>, vector<32x32xf32>
    %cst_9 = arith.constant dense<0.000000e+00> : vector<8x32xf32>
    %10 = tpu.matmul %8, %9, %cst_9 {dimension_numbers = #tpu.dot_dimension_numbers<[1], [0], [0], [1], [0, 0, 1, 1], [], []>} : vector<8x32xf32>, vector<32x32xf32>, vector<8x32xf32> -> vector<8x32xf32>
    %c0_10 = arith.constant 0 : index
    %c0_11 = arith.constant 0 : index
    %11 = vector.load %arg5[%c0_10, %c0_11] : memref<1x32xf32, #tpu.memory_space<vmem>>, vector<1x32xf32>
    %12 = vector.broadcast %11 : vector<1x32xf32> to vector<8x32xf32>
    %13 = arith.addf %10, %12 : vector<8x32xf32>
    %cst_12 = arith.constant 0.000000e+00 : f32
    %14 = vector.broadcast %cst_12 : f32 to vector<8x32xf32>
    %15 = arith.maximumf %13, %14 : vector<8x32xf32>
    %c0_13 = arith.constant 0 : index
    %c0_14 = arith.constant 0 : index
    %16 = vector.load %arg6[%c0_13, %c0_14] : memref<32x48xf32, #tpu.memory_space<vmem>>, vector<32x48xf32>
    %cst_15 = arith.constant dense<0.000000e+00> : vector<8x48xf32>
    %17 = tpu.matmul %15, %16, %cst_15 {dimension_numbers = #tpu.dot_dimension_numbers<[1], [0], [0], [1], [0, 0, 1, 1], [], []>} : vector<8x32xf32>, vector<32x48xf32>, vector<8x48xf32> -> vector<8x48xf32>
    %c0_16 = arith.constant 0 : index
    %c0_17 = arith.constant 0 : index
    %18 = vector.load %arg7[%c0_16, %c0_17] : memref<1x48xf32, #tpu.memory_space<vmem>>, vector<1x48xf32>
    %19 = vector.broadcast %18 : vector<1x48xf32> to vector<8x48xf32>
    %20 = arith.addf %17, %19 : vector<8x48xf32>
    %cst_18 = arith.constant 0.000000e+00 : f32
    %21 = vector.broadcast %cst_18 : f32 to vector<8x48xf32>
    %22 = arith.maximumf %20, %21 : vector<8x48xf32>
    %c0_19 = arith.constant 0 : index
    %c0_20 = arith.constant 0 : index
    %23 = vector.load %arg8[%c0_19, %c0_20] : memref<48x48xf32, #tpu.memory_space<vmem>>, vector<48x48xf32>
    %cst_21 = arith.constant dense<0.000000e+00> : vector<8x48xf32>
    %24 = tpu.matmul %22, %23, %cst_21 {dimension_numbers = #tpu.dot_dimension_numbers<[1], [0], [0], [1], [0, 0, 1, 1], [], []>} : vector<8x48xf32>, vector<48x48xf32>, vector<8x48xf32> -> vector<8x48xf32>
    %c0_22 = arith.constant 0 : index
    %c0_23 = arith.constant 0 : index
    %25 = vector.load %arg9[%c0_22, %c0_23] : memref<1x48xf32, #tpu.memory_space<vmem>>, vector<1x48xf32>
    %26 = vector.broadcast %25 : vector<1x48xf32> to vector<8x48xf32>
    %27 = arith.addf %24, %26 : vector<8x48xf32>
    %28 = vector.extract_strided_slice %27 {offsets = [0, 0], sizes = [8, 16], strides = [1, 1]} : vector<8x48xf32> to vector<8x16xf32>
    %cst_24 = arith.constant dense<0.000000e+00> : vector<8x8xf32>
    %29 = tpu.matmul %28, %28, %cst_24 {dimension_numbers = #tpu.dot_dimension_numbers<[1], [1], [0], [0], [0, 0, 1, 0], [], []>} : vector<8x16xf32>, vector<8x16xf32>, vector<8x8xf32> -> vector<8x8xf32>
    %c0_25 = arith.constant 0 : index
    %c0_26 = arith.constant 0 : index
    %c0_27 = arith.constant 0 : index
    %c0_28 = arith.constant 0 : index
    %30 = vector.load %arg10[%c0_25, %c0_26, %c0_27, %c0_28] : memref<1x3x8x8xf32, #tpu.memory_space<vmem>>, vector<1x1x8x8xf32>
    %31 = vector.shape_cast %30 : vector<1x1x8x8xf32> to vector<8x8xf32>
    %32 = vector.shape_cast %29 : vector<8x8xf32> to vector<1x1x8x8xf32>
    tpu.vector_store %arg10[%c0_25, %c0_26, %c0_27, %c0_28], %32 {strides = array<i32>} : memref<1x3x8x8xf32, #tpu.memory_space<vmem>>, vector<1x1x8x8xf32>,
    %33 = vector.extract_strided_slice %27 {offsets = [0, 16], sizes = [8, 16], strides = [1, 1]} : vector<8x48xf32> to vector<8x16xf32>
    %cst_29 = arith.constant dense<0.000000e+00> : vector<8x8xf32>
    %34 = tpu.matmul %33, %33, %cst_29 {dimension_numbers = #tpu.dot_dimension_numbers<[1], [1], [0], [0], [0, 0, 1, 0], [], []>} : vector<8x16xf32>, vector<8x16xf32>, vector<8x8xf32> -> vector<8x8xf32>
    %c0_30 = arith.constant 0 : index
    %c1 = arith.constant 1 : index
    %c0_31 = arith.constant 0 : index
    %c0_32 = arith.constant 0 : index
    %35 = vector.load %arg10[%c0_30, %c1, %c0_31, %c0_32] : memref<1x3x8x8xf32, #tpu.memory_space<vmem>>, vector<1x1x8x8xf32>
    %36 = vector.shape_cast %35 : vector<1x1x8x8xf32> to vector<8x8xf32>
    %37 = vector.shape_cast %34 : vector<8x8xf32> to vector<1x1x8x8xf32>
    tpu.vector_store %arg10[%c0_30, %c1, %c0_31, %c0_32], %37 {strides = array<i32>} : memref<1x3x8x8xf32, #tpu.memory_space<vmem>>, vector<1x1x8x8xf32>,
    %38 = vector.extract_strided_slice %27 {offsets = [0, 32], sizes = [8, 16], strides = [1, 1]} : vector<8x48xf32> to vector<8x16xf32>
    %cst_33 = arith.constant dense<0.000000e+00> : vector<8x8xf32>
    %39 = tpu.matmul %38, %38, %cst_33 {dimension_numbers = #tpu.dot_dimension_numbers<[1], [1], [0], [0], [0, 0, 1, 0], [], []>} : vector<8x16xf32>, vector<8x16xf32>, vector<8x8xf32> -> vector<8x8xf32>
    %c0_34 = arith.constant 0 : index
    %c2 = arith.constant 2 : index
    %c0_35 = arith.constant 0 : index
    %c0_36 = arith.constant 0 : index
    %40 = vector.load %arg10[%c0_34, %c2, %c0_35, %c0_36] : memref<1x3x8x8xf32, #tpu.memory_space<vmem>>, vector<1x1x8x8xf32>
    %41 = vector.shape_cast %40 : vector<1x1x8x8xf32> to vector<8x8xf32>
    %42 = vector.shape_cast %39 : vector<8x8xf32> to vector<1x1x8x8xf32>
    tpu.vector_store %arg10[%c0_34, %c2, %c0_35, %c0_36], %42 {strides = array<i32>} : memref<1x3x8x8xf32, #tpu.memory_space<vmem>>, vector<1x1x8x8xf32>,
    return
  }
  func.func @transform_0(%arg0: i32) -> (i32, i32, i32) {
    %c0_i32 = arith.constant 0 : i32
    %c0_i32_0 = arith.constant 0 : i32
    %c0_i32_1 = arith.constant 0 : i32
    return %arg0, %c0_i32, %c0_i32_0 : i32, i32, i32
  }
  func.func @transform_1(%arg0: i32) -> (i32, i32) {
    %c0_i32 = arith.constant 0 : i32
    %c0_i32_0 = arith.constant 0 : i32
    %c0_i32_1 = arith.constant 0 : i32
    return %c0_i32, %c0_i32_0 : i32, i32
  }
  func.func @transform_2(%arg0: i32) -> (i32, i32) {
    %c0_i32 = arith.constant 0 : i32
    %c0_i32_0 = arith.constant 0 : i32
    %c0_i32_1 = arith.constant 0 : i32
    return %c0_i32, %c0_i32_0 : i32, i32
  }
  func.func @transform_3(%arg0: i32) -> (i32, i32) {
    %c0_i32 = arith.constant 0 : i32
    %c0_i32_0 = arith.constant 0 : i32
    %c0_i32_1 = arith.constant 0 : i32
    return %c0_i32, %c0_i32_0 : i32, i32
  }
  func.func @transform_4(%arg0: i32) -> (i32, i32) {
    %c0_i32 = arith.constant 0 : i32
    %c0_i32_0 = arith.constant 0 : i32
    %c0_i32_1 = arith.constant 0 : i32
    return %c0_i32, %c0_i32_0 : i32, i32
  }
  func.func @transform_5(%arg0: i32) -> (i32, i32) {
    %c0_i32 = arith.constant 0 : i32
    %c0_i32_0 = arith.constant 0 : i32
    %c0_i32_1 = arith.constant 0 : i32
    return %c0_i32, %c0_i32_0 : i32, i32
  }
  func.func @transform_6(%arg0: i32) -> (i32, i32) {
    %c0_i32 = arith.constant 0 : i32
    %c0_i32_0 = arith.constant 0 : i32
    %c0_i32_1 = arith.constant 0 : i32
    return %c0_i32, %c0_i32_0 : i32, i32
  }
  func.func @transform_7(%arg0: i32) -> (i32, i32) {
    %c0_i32 = arith.constant 0 : i32
    %c0_i32_0 = arith.constant 0 : i32
    %c0_i32_1 = arith.constant 0 : i32
    return %c0_i32, %c0_i32_0 : i32, i32
  }
  func.func @transform_8(%arg0: i32) -> (i32, i32) {
    %c0_i32 = arith.constant 0 : i32
    %c0_i32_0 = arith.constant 0 : i32
    %c0_i32_1 = arith.constant 0 : i32
    return %c0_i32, %c0_i32_0 : i32, i32
  }
  func.func @transform_9(%arg0: i32) -> (i32, i32, i32, i32) {
    %c0_i32 = arith.constant 0 : i32
    %c0_i32_0 = arith.constant 0 : i32
    %c0_i32_1 = arith.constant 0 : i32
    %c0_i32_2 = arith.constant 0 : i32
    return %arg0, %c0_i32, %c0_i32_0, %c0_i32_1 : i32, i32, i32, i32
  }
}

</mosaic_0001>

<llo_original>
// kernel: tpu_custom_call.1
$region0: #{tpu_custom_call.1}
  #allocation0 [shape = 'u32[]', space=smem, size = 0x4, offset = 0x4, fixed_abs, tag = 'smem constant byte address 0x4 - core index']
  #allocation1 [shape = 'u32[72,128]{1,0:T(1,128)}', space=vmem, size = 0x9000, scoped, tag = 'internal scratch']
  %s0 = inlined_call_operand.hbm [shape: f32[2,8,16], index: 0, kind: input, shape index: {}]
  %s1 = inlined_call_operand.hbm [shape: f32[16,32], index: 1, kind: input, shape index: {}]
  %s2 = inlined_call_operand.vmem [shape: f32[1,32], index: 2, kind: input, shape index: {}]
  %s3 = inlined_call_operand.hbm [shape: f32[32,32], index: 3, kind: input, shape index: {}]
  %s4 = inlined_call_operand.vmem [shape: f32[1,32], index: 4, kind: input, shape index: {}]
  %s5 = inlined_call_operand.hbm [shape: f32[32,48], index: 5, kind: input, shape index: {}]
  %s6 = inlined_call_operand.vmem [shape: f32[1,48], index: 6, kind: input, shape index: {}]
  %s7 = inlined_call_operand.hbm [shape: f32[48,48], index: 7, kind: input, shape index: {}]
  %s8 = inlined_call_operand.vmem [shape: f32[1,48], index: 8, kind: input, shape index: {}]
  %s9 = inlined_call_operand.hbm [shape: f32[2,3,8,8], index: 9, kind: output, shape index: {}]
  %s10 = sld [smem:[#allocation0]]
  $region89: #{tpu_custom_call.1} parent=0
    _
  %s12 = ssub.s32 1, %s10
  %s13 = scalar_select 0, %s12, %s10
  $region1: #{tpu_custom_call.1} parent=0
    #allocation2 [shape = 'u8[8192]{0}', space=vmem, size = 0x2000, scoped, tag = 'input window, operand 0']
    #allocation3 [shape = 's32[2]{0}', space=sflag, size = 0x8, scoped, tag = 'scoped memory for tpu_custom_call.1']
    #allocation4 [shape = 's32[2]{0}', space=sflag, size = 0x8, scoped, tag = 'scoped memory for tpu_custom_call.1']
    #allocation5 [shape = 'u8[8192]{0}', space=vmem, size = 0x2000, scoped, tag = 'input window, operand 1, single buffered']
    #allocation6 [shape = 's32[1]{0}', space=sflag, size = 0x4, scoped, tag = 'scoped memory for tpu_custom_call.1']
    #allocation7 [shape = 'u8[16384]{0}', space=vmem, size = 0x4000, scoped, tag = 'input window, operand 3, single buffered']
    #allocation8 [shape = 'u8[16384]{0}', space=vmem, size = 0x4000, scoped, tag = 'input window, operand 5, single buffered']
    #allocation9 [shape = 's32[1]{0}', space=sflag, size = 0x4, scoped, tag = 'scoped memory for tpu_custom_call.1']
    #allocation10 [shape = 'u8[24576]{0}', space=vmem, size = 0x6000, scoped, tag = 'input window, operand 7, single buffered']
    #allocation11 [shape = 'u8[24576]{0}', space=vmem, size = 0x6000, scoped, tag = 'output window, operand 0']
    %14 = vsyncpa [#allocation3], 0
    %s15 = scalar_lea.sflag [#allocation3], 1
    %16 = vsyncpa %s15, 0
    %17 = vsyncpa [#allocation6], 0
    %18 = vsyncpa [#allocation9], 0
    %19 = vsyncpa [#allocation4], 0
    %s20 = scalar_lea.sflag [#allocation4], 1
    %21 = vsyncpa %s20, 0
    loop: start=0, step=1, limit=4
    $region2: #{tpu_custom_call.1} parent=1 // loop_pre_header
      _
    $region3: #{tpu_custom_call.1} parent=1 // loop_header
      %s23 = sphi 0, %s27
      %p24 = scmp.ge.s32.totalorder %s23, 4
      %s33 = sphi 0, %s35
      %s36 = sphi 0, %s33
      %s37 = sphi 0, %s36
      %s53 = sphi 0, %s37
      %s57 = sphi 0, %s57
      %s59 = sphi 0, %s57
      %s60 = sphi 0, %s59
      %s74 = sphi 0, %s60
      %s78 = sphi 0, %s78
      %s80 = sphi 0, %s78
      %s81 = sphi 0, %s80
      %s95 = sphi 0, %s81
      %s99 = sphi 0, %s99
      %s101 = sphi 0, %s99
      %s102 = sphi 0, %s101
      %s116 = sphi 0, %s102
      %s120 = sphi 0, %s120
      %s122 = sphi 0, %s120
      %s123 = sphi 0, %s122
      %s137 = sphi 0, %s123
      %s141 = sphi 0, %s141
      %s143 = sphi 0, %s141
      %s144 = sphi 0, %s143
      %s158 = sphi 0, %s144
      %s162 = sphi 0, %s162
      %s164 = sphi 0, %s162
      %s165 = sphi 0, %s164
      %s179 = sphi 0, %s165
      %s183 = sphi 0, %s183
      %s185 = sphi 0, %s183
      %s186 = sphi 0, %s185
      %s200 = sphi 0, %s186
      %s204 = sphi 0, %s204
      %s206 = sphi 0, %s204
      %s207 = sphi 0, %s206
      %s221 = sphi 0, %s207
      %s227 = sphi 0, %s229
      %s230 = sphi 0, %s227
      %s231 = sphi 0, %s230
      %s247 = sphi 0, %s231
    $region4: #{tpu_custom_call.1} parent=1 // loop_header_branch
      %26 = sbr.rel (%p24) target = $region8
    $region5: #{tpu_custom_call.1} parent=1 // loop_body
      %s28 = ssub.s32 %s23, 1
      %s29 = ssub.s32 %s23, 2
      %s30 = sadd.s32 %s23, 1
      %s31 = ssub.s32 %s23, %s30
      %p32 = scmp.eq.s32.totalorder %s31, 0
      %s34 = sadd.s32 %s33, 1
      %s35 = scalar_select %p32, %s33, %s34
      %p38 = pneg %p32
      %p39 = scmp.eq.s32.totalorder %s23, 1
      %p40 = por %p38, %p39
      %p41 = scmp.ne.s32.totalorder %s33, %s36
      %p42 = scmp.eq.s32.totalorder %s23, 0
      %p43 = por %p41, %p42
      %p44 = scmp.ne.s32.totalorder %s33, %s36
      %p45 = scmp.eq.s32.totalorder %s28, 1
      %p46 = por %p44, %p45
      %p47 = scmp.ne.s32.totalorder %s36, %s37
      %p48 = scmp.eq.s32.totalorder %s28, 0
      %p49 = por %p47, %p48
      %p50 = scmp.ne.s32.totalorder %s36, %s37
      %p51 = scmp.eq.s32.totalorder %s29, 1
      %p52 = por %p50, %p51
      %p54 = scmp.ne.s32.totalorder %s37, %s53
      %p55 = scmp.eq.s32.totalorder %s29, 0
      %p56 = por %p54, %p55
      %s58 = sadd.s32 %s57, 1
      %p61 = scmp.eq.s32.totalorder %s23, 1
      %p62 = scmp.ne.s32.totalorder %s57, %s59
      %p63 = scmp.eq.s32.totalorder %s23, 0
      %p64 = por %p62, %p63
      %p65 = scmp.ne.s32.totalorder %s57, %s59
      %p66 = scmp.eq.s32.totalorder %s28, 1
      %p67 = por %p65, %p66
      %p68 = scmp.ne.s32.totalorder %s59, %s60
      %p69 = scmp.eq.s32.totalorder %s28, 0
      %p70 = por %p68, %p69
      %p71 = scmp.ne.s32.totalorder %s59, %s60
      %p72 = scmp.eq.s32.totalorder %s29, 1
      %p73 = por %p71, %p72
      %p75 = scmp.ne.s32.totalorder %s60, %s74
      %p76 = scmp.eq.s32.totalorder %s29, 0
      %p77 = por %p75, %p76
      %s79 = sadd.s32 %s78, 1
      %p82 = scmp.eq.s32.totalorder %s23, 1
      %p83 = scmp.ne.s32.totalorder %s78, %s80
      %p84 = scmp.eq.s32.totalorder %s23, 0
      %p85 = por %p83, %p84
      %p86 = scmp.ne.s32.totalorder %s78, %s80
      %p87 = scmp.eq.s32.totalorder %s28, 1
      %p88 = por %p86, %p87
      %p89 = scmp.ne.s32.totalorder %s80, %s81
      %p90 = scmp.eq.s32.totalorder %s28, 0
      %p91 = por %p89, %p90
      %p92 = scmp.ne.s32.totalorder %s80, %s81
      %p93 = scmp.eq.s32.totalorder %s29, 1
      %p94 = por %p92, %p93
      %p96 = scmp.ne.s32.totalorder %s81, %s95
      %p97 = scmp.eq.s32.totalorder %s29, 0
      %p98 = por %p96, %p97
      %s100 = sadd.s32 %s99, 1
      %p103 = scmp.eq.s32.totalorder %s23, 1
      %p104 = scmp.ne.s32.totalorder %s99, %s101
      %p105 = scmp.eq.s32.totalorder %s23, 0
      %p106 = por %p104, %p105
      %p107 = scmp.ne.s32.totalorder %s99, %s101
      %p108 = scmp.eq.s32.totalorder %s28, 1
      %p109 = por %p107, %p108
      %p110 = scmp.ne.s32.totalorder %s101, %s102
      %p111 = scmp.eq.s32.totalorder %s28, 0
      %p112 = por %p110, %p111
      %p113 = scmp.ne.s32.totalorder %s101, %s102
      %p114 = scmp.eq.s32.totalorder %s29, 1
      %p115 = por %p113, %p114
      %p117 = scmp.ne.s32.totalorder %s102, %s116
      %p118 = scmp.eq.s32.totalorder %s29, 0
      %p119 = por %p117, %p118
      %s121 = sadd.s32 %s120, 1
      %p124 = scmp.eq.s32.totalorder %s23, 1
      %p125 = scmp.ne.s32.totalorder %s120, %s122
      %p126 = scmp.eq.s32.totalorder %s23, 0
      %p127 = por %p125, %p126
      %p128 = scmp.ne.s32.totalorder %s120, %s122
      %p129 = scmp.eq.s32.totalorder %s28, 1
      %p130 = por %p128, %p129
      %p131 = scmp.ne.s32.totalorder %s122, %s123
      %p132 = scmp.eq.s32.totalorder %s28, 0
      %p133 = por %p131, %p132
      %p134 = scmp.ne.s32.totalorder %s122, %s123
      %p135 = scmp.eq.s32.totalorder %s29, 1
      %p136 = por %p134, %p135
      %p138 = scmp.ne.s32.totalorder %s123, %s137
      %p139 = scmp.eq.s32.totalorder %s29, 0
      %p140 = por %p138, %p139
      %s142 = sadd.s32 %s141, 1
      %p145 = scmp.eq.s32.totalorder %s23, 1
      %p146 = scmp.ne.s32.totalorder %s141, %s143
      %p147 = scmp.eq.s32.totalorder %s23, 0
      %p148 = por %p146, %p147
      %p149 = scmp.ne.s32.totalorder %s141, %s143
      %p150 = scmp.eq.s32.totalorder %s28, 1
      %p151 = por %p149, %p150
      %p152 = scmp.ne.s32.totalorder %s143, %s144
      %p153 = scmp.eq.s32.totalorder %s28, 0
      %p154 = por %p152, %p153
      %p155 = scmp.ne.s32.totalorder %s143, %s144
      %p156 = scmp.eq.s32.totalorder %s29, 1
      %p157 = por %p155, %p156
      %p159 = scmp.ne.s32.totalorder %s144, %s158
      %p160 = scmp.eq.s32.totalorder %s29, 0
      %p161 = por %p159, %p160
      %s163 = sadd.s32 %s162, 1
      %p166 = scmp.eq.s32.totalorder %s23, 1
      %p167 = scmp.ne.s32.totalorder %s162, %s164
      %p168 = scmp.eq.s32.totalorder %s23, 0
      %p169 = por %p167, %p168
      %p170 = scmp.ne.s32.totalorder %s162, %s164
      %p171 = scmp.eq.s32.totalorder %s28, 1
      %p172 = por %p170, %p171
      %p173 = scmp.ne.s32.totalorder %s164, %s165
      %p174 = scmp.eq.s32.totalorder %s28, 0
      %p175 = por %p173, %p174
      %p176 = scmp.ne.s32.totalorder %s164, %s165
      %p177 = scmp.eq.s32.totalorder %s29, 1
      %p178 = por %p176, %p177
      %p180 = scmp.ne.s32.totalorder %s165, %s179
      %p181 = scmp.eq.s32.totalorder %s29, 0
      %p182 = por %p180, %p181
      %s184 = sadd.s32 %s183, 1
      %p187 = scmp.eq.s32.totalorder %s23, 1
      %p188 = scmp.ne.s32.totalorder %s183, %s185
      %p189 = scmp.eq.s32.totalorder %s23, 0
      %p190 = por %p188, %p189
      %p191 = scmp.ne.s32.totalorder %s183, %s185
      %p192 = scmp.eq.s32.totalorder %s28, 1
      %p193 = por %p191, %p192
      %p194 = scmp.ne.s32.totalorder %s185, %s186
      %p195 = scmp.eq.s32.totalorder %s28, 0
      %p196 = por %p194, %p195
      %p197 = scmp.ne.s32.totalorder %s185, %s186
      %p198 = scmp.eq.s32.totalorder %s29, 1
      %p199 = por %p197, %p198
      %p201 = scmp.ne.s32.totalorder %s186, %s200
      %p202 = scmp.eq.s32.totalorder %s29, 0
      %p203 = por %p201, %p202
      %s205 = sadd.s32 %s204, 1
      %p208 = scmp.eq.s32.totalorder %s23, 1
      %p209 = scmp.ne.s32.totalorder %s204, %s206
      %p210 = scmp.eq.s32.totalorder %s23, 0
      %p211 = por %p209, %p210
      %p212 = scmp.ne.s32.totalorder %s204, %s206
      %p213 = scmp.eq.s32.totalorder %s28, 1
      %p214 = por %p212, %p213
      %p215 = scmp.ne.s32.totalorder %s206, %s207
      %p216 = scmp.eq.s32.totalorder %s28, 0
      %p217 = por %p215, %p216
      %p218 = scmp.ne.s32.totalorder %s206, %s207
      %p219 = scmp.eq.s32.totalorder %s29, 1
      %p220 = por %p218, %p219
      %p222 = scmp.ne.s32.totalorder %s207, %s221
      %p223 = scmp.eq.s32.totalorder %s29, 0
      %p224 = por %p222, %p223
      %s225 = ssub.s32 %s23, %s30
      %p226 = scmp.eq.s32.totalorder %s225, 0
      %s228 = sadd.s32 %s227, 1
      %s229 = scalar_select %p226, %s227, %s228
      %p232 = pneg %p226
      %p233 = scmp.eq.s32.totalorder %s23, 1
      %p234 = por %p232, %p233
      %p235 = scmp.ne.s32.totalorder %s227, %s230
      %p236 = scmp.eq.s32.totalorder %s23, 0
      %p237 = por %p235, %p236
      %p238 = scmp.ne.s32.totalorder %s227, %s230
      %p239 = scmp.eq.s32.totalorder %s28, 1
      %p240 = por %p238, %p239
      %p241 = scmp.ne.s32.totalorder %s230, %s231
      %p242 = scmp.eq.s32.totalorder %s28, 0
      %p243 = por %p241, %p242
      %p244 = scmp.ne.s32.totalorder %s230, %s231
      %p245 = scmp.eq.s32.totalorder %s29, 1
      %p246 = por %p244, %p245
      %p248 = scmp.ne.s32.totalorder %s231, %s247
      %p249 = scmp.eq.s32.totalorder %s29, 0
      %p250 = por %p248, %p249
      %p251 = scmp.le.s32.totalorder 1, %s23
      %p252 = scmp.lt.s32.totalorder %s23, 3
      %p253 = pnand %p251, %p252
      %p254 = pneg %p253
      // Predicated region
      $region9: #{tpu_custom_call.1} parent=5 // pred_check
        _
      $region10: #{tpu_custom_call.1} parent=5 // pred_check_branch
        %256 = sbr.rel (%p253) target = $region12
      $region11: #{tpu_custom_call.1} parent=5 // pred_region
        %s257 = ssub.s32 %s23, 1
        // Predicated region
        $region13: #{tpu_custom_call.1} parent=11 // pred_check
          %p258 = pneg %p70
        $region14: #{tpu_custom_call.1} parent=11 // pred_check_branch
          %260 = sbr.rel (%p258) target = $region16
        $region15: #{tpu_custom_call.1} parent=11 // pred_region
          %262 = vsyncadd [#allocation6], 0
          %s263 = sshll.u32 %s1, 4
          %s264 = int_to_ptr.hbm [resolvable:$true] %s263
          %s265 = sshll.u32 [#allocation5], 4
          %s266 = int_to_ptr.vmem [resolvable:$true] %s265
          %271 = dma.hbm_to_vmem [thread:$0]  %s264, 256, %s266, [#allocation6], 128, 128, 8
        $region16: #{tpu_custom_call.1} parent=11 // pred_fallthru
          _
        // Predicated region
        $region17: #{tpu_custom_call.1} parent=11 // pred_check
          %p272 = pneg %p91
        $region18: #{tpu_custom_call.1} parent=11 // pred_check_branch
          %274 = sbr.rel (%p272) target = $region20
        $region19: #{tpu_custom_call.1} parent=11 // pred_region
          _
        $region20: #{tpu_custom_call.1} parent=11 // pred_fallthru
          _
        // Predicated region
        $region21: #{tpu_custom_call.1} parent=11 // pred_check
          %p275 = pneg %p112
        $region22: #{tpu_custom_call.1} parent=11 // pred_check_branch
          %277 = sbr.rel (%p275) target = $region24
        $region23: #{tpu_custom_call.1} parent=11 // pred_region
          %279 = vsyncadd [#allocation6], 0
          %s280 = sshll.u32 %s3, 4
          %s281 = int_to_ptr.hbm [resolvable:$true] %s280
          %s282 = sshll.u32 [#allocation7], 4
          %s283 = int_to_ptr.vmem [resolvable:$true] %s282
          %288 = dma.hbm_to_vmem [thread:$0]  %s281, 512, %s283, [#allocation6], 128, 128, 8
        $region24: #{tpu_custom_call.1} parent=11 // pred_fallthru
          _
        // Predicated region
        $region25: #{tpu_custom_call.1} parent=11 // pred_check
          %p289 = pneg %p133
        $region26: #{tpu_custom_call.1} parent=11 // pred_check_branch
          %291 = sbr.rel (%p289) target = $region28
        $region27: #{tpu_custom_call.1} parent=11 // pred_region
          _
        $region28: #{tpu_custom_call.1} parent=11 // pred_fallthru
          _
        // Predicated region
        $region29: #{tpu_custom_call.1} parent=11 // pred_check
          %p292 = pneg %p154
        $region30: #{tpu_custom_call.1} parent=11 // pred_check_branch
          %294 = sbr.rel (%p292) target = $region32
        $region31: #{tpu_custom_call.1} parent=11 // pred_region
          %296 = vsyncadd [#allocation9], 0
          %s297 = sshll.u32 %s5, 4
          %s298 = int_to_ptr.hbm [resolvable:$true] %s297
          %s299 = sshll.u32 [#allocation8], 4
          %s300 = int_to_ptr.vmem [resolvable:$true] %s299
          %305 = dma.hbm_to_vmem [thread:$0]  %s298, 512, %s300, [#allocation9], 128, 128, 8
        $region32: #{tpu_custom_call.1} parent=11 // pred_fallthru
          _
        // Predicated region
        $region33: #{tpu_custom_call.1} parent=11 // pred_check
          %p306 = pneg %p175
        $region34: #{tpu_custom_call.1} parent=11 // pred_check_branch
          %308 = sbr.rel (%p306) target = $region36
        $region35: #{tpu_custom_call.1} parent=11 // pred_region
          _
        $region36: #{tpu_custom_call.1} parent=11 // pred_fallthru
          _
        // Predicated region
        $region37: #{tpu_custom_call.1} parent=11 // pred_check
          %p309 = pneg %p196
        $region38: #{tpu_custom_call.1} parent=11 // pred_check_branch
          %311 = sbr.rel (%p309) target = $region40
        $region39: #{tpu_custom_call.1} parent=11 // pred_region
          %313 = vsyncadd [#allocation9], 0
          %s314 = sshll.u32 %s7, 4
          %s315 = int_to_ptr.hbm [resolvable:$true] %s314
          %s316 = sshll.u32 [#allocation10], 4
          %s317 = int_to_ptr.vmem [resolvable:$true] %s316
          %322 = dma.hbm_to_vmem [thread:$0]  %s315, 768, %s317, [#allocation9], 128, 128, 8
        $region40: #{tpu_custom_call.1} parent=11 // pred_fallthru
          _
        // Predicated region
        $region41: #{tpu_custom_call.1} parent=11 // pred_check
          %p323 = pneg %p217
        $region42: #{tpu_custom_call.1} parent=11 // pred_check_branch
          %325 = sbr.rel (%p323) target = $region44
        $region43: #{tpu_custom_call.1} parent=11 // pred_region
          _
        $region44: #{tpu_custom_call.1} parent=11 // pred_fallthru
          _
      $region12: #{tpu_custom_call.1} parent=5 // pred_fallthru
        _
      %p326 = scmp.lt.s32.totalorder %s23, 2
      // Predicated region
      $region45: #{tpu_custom_call.1} parent=5 // pred_check
        %p327 = pneg %p326
      $region46: #{tpu_custom_call.1} parent=5 // pred_check_branch
        %329 = sbr.rel (%p327) target = $region48
      $region47: #{tpu_custom_call.1} parent=5 // pred_region
        // Predicated region
        $region49: #{tpu_custom_call.1} parent=47 // pred_check
          %p330 = pneg %p43
        $region50: #{tpu_custom_call.1} parent=47 // pred_check_branch
          %332 = sbr.rel (%p330) target = $region52
        $region51: #{tpu_custom_call.1} parent=47 // pred_region
          %s333 = sand.u32 %s33, 1
          %s334 = scalar_lea.sflag [#allocation3], %s333
          %s335 = sand.u32 %s33, 1
          %s336 = smul.addr %s335, 8
          %s337 = scalar_lea.vmem [#allocation2], %s336
          %339 = vsyncadd %s334, 0
          %s340 = smul.addr %s23, 8
          %s341 = scalar_lea.hbm %s0, %s340
          %s343 = sshll.u32 %s341, 4
          %s344 = int_to_ptr.hbm [resolvable:$true] %s343
          %s345 = sshll.u32 %s337, 4
          %s346 = int_to_ptr.vmem [resolvable:$true] %s345
          %348 = dma.hbm_to_vmem [thread:$0]  %s344, 128, %s346, %s334
        $region52: #{tpu_custom_call.1} parent=47 // pred_fallthru
          _
      $region48: #{tpu_custom_call.1} parent=5 // pred_fallthru
        _
      %p349 = scmp.le.s32.totalorder 1, %s23
      %p350 = scmp.lt.s32.totalorder %s23, 3
      %p351 = pnand %p349, %p350
      %p352 = pneg %p351
      // Predicated region
      $region53: #{tpu_custom_call.1} parent=5 // pred_check
        _
      $region54: #{tpu_custom_call.1} parent=5 // pred_check_branch
        %354 = sbr.rel (%p351) target = $region56
      $region55: #{tpu_custom_call.1} parent=5 // pred_region
        %s355 = ssub.s32 %s23, 1
        %s356 = sand.u32 %s36, 1
        %s357 = scalar_lea.sflag [#allocation3], %s356
        %s358 = sand.u32 %s36, 1
        %s359 = smul.addr %s358, 8
        %s360 = scalar_lea.vmem [#allocation2], %s359
        // Predicated region
        $region57: #{tpu_custom_call.1} parent=55 // pred_check
          %p361 = pneg %p49
        $region58: #{tpu_custom_call.1} parent=55 // pred_check_branch
          %363 = sbr.rel (%p361) target = $region60
        $region59: #{tpu_custom_call.1} parent=55 // pred_region
          %365 = dma.done %s357, 128
        $region60: #{tpu_custom_call.1} parent=55 // pred_fallthru
          _
        // Predicated region
        $region61: #{tpu_custom_call.1} parent=55 // pred_check
          %p366 = pneg %p70
        $region62: #{tpu_custom_call.1} parent=55 // pred_check_branch
          %368 = sbr.rel (%p366) target = $region64
        $region63: #{tpu_custom_call.1} parent=55 // pred_region
          %370 = dma.done [#allocation6], 256
        $region64: #{tpu_custom_call.1} parent=55 // pred_fallthru
          _
        // Predicated region
        $region65: #{tpu_custom_call.1} parent=55 // pred_check
          %p371 = pneg %p112
        $region66: #{tpu_custom_call.1} parent=55 // pred_check_branch
          %373 = sbr.rel (%p371) target = $region68
        $region67: #{tpu_custom_call.1} parent=55 // pred_region
          %375 = dma.done [#allocation6], 512
        $region68: #{tpu_custom_call.1} parent=55 // pred_fallthru
          _
        // Predicated region
        $region69: #{tpu_custom_call.1} parent=55 // pred_check
          %p376 = pneg %p154
        $region70: #{tpu_custom_call.1} parent=55 // pred_check_branch
          %378 = sbr.rel (%p376) target = $region72
        $region71: #{tpu_custom_call.1} parent=55 // pred_region
          %380 = dma.done [#allocation9], 512
        $region72: #{tpu_custom_call.1} parent=55 // pred_fallthru
          _
        // Predicated region
        $region73: #{tpu_custom_call.1} parent=55 // pred_check
          %p381 = pneg %p196
        $region74: #{tpu_custom_call.1} parent=55 // pred_check_branch
          %383 = sbr.rel (%p381) target = $region76
        $region75: #{tpu_custom_call.1} parent=55 // pred_region
          %385 = dma.done [#allocation9], 768
        $region76: #{tpu_custom_call.1} parent=55 // pred_fallthru
          _
        %s386 = sand.u32 %s36, 1
        %s387 = scalar_lea.sflag [#allocation3], %s386
        %s388 = sand.u32 %s36, 1
        %s389 = smul.addr %s388, 8
        %s390 = scalar_lea.vmem [#allocation2], %s389
        %p391 = pneg %p49
        %p392 = pneg %p46
        %p393 = pneg %p70
        %p394 = pneg %p67
        %p395 = pneg %p91
        %p396 = pneg %p88
        %p397 = pneg %p112
        %p398 = pneg %p109
        %p399 = pneg %p133
        %p400 = pneg %p130
        %p401 = pneg %p154
        %p402 = pneg %p151
        %p403 = pneg %p175
        %p404 = pneg %p172
        %p405 = pneg %p196
        %p406 = pneg %p193
        %p407 = pneg %p217
        %p408 = pneg %p214
        %p409 = pneg %p243
        %p410 = pneg %p240
        %s411 = sand.u32 %s230, 1
        %s412 = scalar_lea.sflag [#allocation4], %s411
        %s413 = sand.u32 %s230, 1
        %s414 = smul.addr %s413, 24
        %s415 = scalar_lea.vmem [#allocation11], %s414
        %v416 = vld [vmem:[%s360] sm:$0xff]
        %v417 = vld [vmem:[#allocation5] sm:$0xff]
        %v418 = vld [vmem:[#allocation5 + $0x8] sm:$0xff]
        %v419 = vld [vmem:[%s2] sm:$0x1]
        %v421 = vperm.slane %v419, 0
        %vm423 = vcmask 130048
        %v425 = vsel %vm423, %v416, 0
        %427 = vmatpush.msra.mxu0 0.0
        %428 = vmatpush.msra.mxu0 0.0
        %429 = vmatpush.msra.mxu0 0.0
        %430 = vmatpush.msra.mxu0 0.0
        %431 = vmatpush.msra.mxu0 0.0
        %432 = vmatpush.msra.mxu0 0.0
        %433 = vmatpush.msra.mxu0 0.0
        %434 = vmatpush.msra.mxu0 0.0
        %435 = vmatpush.msra.mxu0 0.0
        %436 = vmatpush.msra.mxu0 0.0
        %437 = vmatpush.msra.mxu0 0.0
        %438 = vmatpush.msra.mxu0 0.0
        %439 = vmatpush.msra.mxu0 0.0
        %440 = vmatpush.msra.mxu0 0.0
        %441 = vmatpush.msra.mxu0 %v418
        %442 = vmatpush.msra.mxu0 %v417
        %443 = vmatmul.f32.gmra.mxu0 %v425
        %v444 = vpop.f32.mrf.mxu0
        %v445 = vadd.f32 %v421, %v444
        %446 = vdwg.mxu0
        %v447 = vmax.f32 %v445, 0.0
        %v448 = vld [vmem:[#allocation7] sm:$0xff]
        %v449 = vld [vmem:[#allocation7 + $0x8] sm:$0xff]
        %v450 = vld [vmem:[#allocation7 + $0x10] sm:$0xff]
        %v451 = vld [vmem:[#allocation7 + $0x18] sm:$0xff]
        %v452 = vld [vmem:[%s4] sm:$0x1]
        %v454 = vperm.slane %v452, 0
        %vm456 = vcmask 261120
        %v458 = vsel %vm456, %v447, 0
        %460 = vmatpush.msra.mxu0 0.0
        %461 = vmatpush.msra.mxu0 0.0
        %462 = vmatpush.msra.mxu0 0.0
        %463 = vmatpush.msra.mxu0 0.0
        %464 = vmatpush.msra.mxu0 0.0
        %465 = vmatpush.msra.mxu0 0.0
        %466 = vmatpush.msra.mxu0 0.0
        %467 = vmatpush.msra.mxu0 0.0
        %468 = vmatpush.msra.mxu0 0.0
        %469 = vmatpush.msra.mxu0 0.0
        %470 = vmatpush.msra.mxu0 0.0
        %471 = vmatpush.msra.mxu0 0.0
        %472 = vmatpush.msra.mxu0 %v451
        %473 = vmatpush.msra.mxu0 %v450
        %474 = vmatpush.msra.mxu0 %v449
        %475 = vmatpush.msra.mxu0 %v448
        %476 = vmatmul.f32.gmra.mxu0 %v458
        %v477 = vpop.f32.mrf.mxu0
        %v478 = vadd.f32 %v454, %v477
        %479 = vdwg.mxu0
        %v480 = vmax.f32 %v478, 0.0
        %v481 = vld [vmem:[#allocation8] sm:$0xff]
        %v482 = vld [vmem:[#allocation8 + $0x8] sm:$0xff]
        %v483 = vld [vmem:[#allocation8 + $0x10] sm:$0xff]
        %v484 = vld [vmem:[#allocation8 + $0x18] sm:$0xff]
        %v485 = vld [vmem:[%s6] sm:$0x1]
        %v487 = vperm.slane %v485, 0
        %v490 = vsel %vm456, %v480, 0
        %492 = vmatpush.msra.mxu0 0.0
        %493 = vmatpush.msra.mxu0 0.0
        %494 = vmatpush.msra.mxu0 0.0
        %495 = vmatpush.msra.mxu0 0.0
        %496 = vmatpush.msra.mxu0 0.0
        %497 = vmatpush.msra.mxu0 0.0
        %498 = vmatpush.msra.mxu0 0.0
        %499 = vmatpush.msra.mxu0 0.0
        %500 = vmatpush.msra.mxu0 0.0
        %501 = vmatpush.msra.mxu0 0.0
        %502 = vmatpush.msra.mxu0 0.0
        %503 = vmatpush.msra.mxu0 0.0
        %504 = vmatpush.msra.mxu0 %v484
        %505 = vmatpush.msra.mxu0 %v483
        %506 = vmatpush.msra.mxu0 %v482
        %507 = vmatpush.msra.mxu0 %v481
        %508 = vmatmul.f32.gmra.mxu0 %v490
        %v509 = vpop.f32.mrf.mxu0
        %v510 = vadd.f32 %v487, %v509
        %511 = vdwg.mxu0
        %v512 = vmax.f32 %v510, 0.0
        %v513 = vld [vmem:[#allocation10] sm:$0xff]
        %v514 = vld [vmem:[#allocation10 + $0x8] sm:$0xff]
        %v515 = vld [vmem:[#allocation10 + $0x10] sm:$0xff]
        %v516 = vld [vmem:[#allocation10 + $0x18] sm:$0xff]
        %v517 = vld [vmem:[#allocation10 + $0x20] sm:$0xff]
        %v518 = vld [vmem:[#allocation10 + $0x28] sm:$0xff]
        %v519 = vld [vmem:[%s8] sm:$0x1]
        %v521 = vperm.slane %v519, 0
        %vm523 = vcmask 392192
        %v525 = vsel %vm523, %v512, 0
        %527 = vmatpush.msra.mxu0 0.0
        %528 = vmatpush.msra.mxu0 0.0
        %529 = vmatpush.msra.mxu0 0.0
        %530 = vmatpush.msra.mxu0 0.0
        %531 = vmatpush.msra.mxu0 0.0
        %532 = vmatpush.msra.mxu0 0.0
        %533 = vmatpush.msra.mxu0 0.0
        %534 = vmatpush.msra.mxu0 0.0
        %535 = vmatpush.msra.mxu0 0.0
        %536 = vmatpush.msra.mxu0 0.0
        %537 = vmatpush.msra.mxu0 %v518
        %538 = vmatpush.msra.mxu0 %v517
        %539 = vmatpush.msra.mxu0 %v516
        %540 = vmatpush.msra.mxu0 %v515
        %541 = vmatpush.msra.mxu0 %v514
        %542 = vmatpush.msra.mxu0 %v513
        %543 = vmatmul.f32.gmra.mxu0 %v525
        %v544 = vpop.f32.mrf.mxu0
        %v545 = vadd.f32 %v521, %v544
        %546 = vdwg.mxu0
        %v548 = vsel %vm423, %v545, 0
        %550 = vmatpush.xpose.msra.mxu0 0.0
        %551 = vmatpush.xpose.msra.mxu0 0.0
        %552 = vmatpush.xpose.msra.mxu0 0.0
        %553 = vmatpush.xpose.msra.mxu0 0.0
        %554 = vmatpush.xpose.msra.mxu0 0.0
        %555 = vmatpush.xpose.msra.mxu0 0.0
        %556 = vmatpush.xpose.msra.mxu0 0.0
        %557 = vmatpush.xpose.msra.mxu0 0.0
        %558 = vmatpush.xpose.msra.mxu0 0.0
        %559 = vmatpush.xpose.msra.mxu0 0.0
        %560 = vmatpush.xpose.msra.mxu0 0.0
        %561 = vmatpush.xpose.msra.mxu0 0.0
        %562 = vmatpush.xpose.msra.mxu0 0.0
        %563 = vmatpush.xpose.msra.mxu0 0.0
        %564 = vmatpush.xpose.msra.mxu0 0.0
        %565 = vmatpush.xpose.msra.mxu0 %v548
        %566 = vmatmul.f32.gmra.mxu0 %v548
        %v567 = vpop.f32.mrf.mxu0
        %v568 = vadd.f32 0.0, %v567
        %569 = vdwg.mxu0
        %vm570 = vcmask 64512
        %571 = vst.msk [vmem:[%s415] sm:$0xff] %vm570, %v568
        %572 = vrot.lane.b32.xlu0 %v545, 112
        %v573 = vpop.permute.xlu0 %572
        %v574 = vsel %vm423, %v573, 0
        %576 = vmatpush.xpose.msra.mxu0 0.0
        %577 = vmatpush.xpose.msra.mxu0 0.0
        %578 = vmatpush.xpose.msra.mxu0 0.0
        %579 = vmatpush.xpose.msra.mxu0 0.0
        %580 = vmatpush.xpose.msra.mxu0 0.0
        %581 = vmatpush.xpose.msra.mxu0 0.0
        %582 = vmatpush.xpose.msra.mxu0 0.0
        %583 = vmatpush.xpose.msra.mxu0 0.0
        %584 = vmatpush.xpose.msra.mxu0 0.0
        %585 = vmatpush.xpose.msra.mxu0 0.0
        %586 = vmatpush.xpose.msra.mxu0 0.0
        %587 = vmatpush.xpose.msra.mxu0 0.0
        %588 = vmatpush.xpose.msra.mxu0 0.0
        %589 = vmatpush.xpose.msra.mxu0 0.0
        %590 = vmatpush.xpose.msra.mxu0 0.0
        %591 = vmatpush.xpose.msra.mxu0 %v574
        %592 = vmatmul.f32.gmra.mxu0 %v574
        %v593 = vpop.f32.mrf.mxu0
        %v594 = vadd.f32 0.0, %v593
        %595 = vdwg.mxu0
        %s596 = scalar_lea.vmem %s415, 8 [#allocation11]
        %597 = vst.msk [vmem:[%s596] sm:$0xff] %vm570, %v594
        %598 = vrot.lane.b32.xlu0 %v545, 96
        %v599 = vpop.permute.xlu0 %598
        %v600 = vsel %vm423, %v599, 0
        %602 = vmatpush.xpose.msra.mxu0 0.0
        %603 = vmatpush.xpose.msra.mxu0 0.0
        %604 = vmatpush.xpose.msra.mxu0 0.0
        %605 = vmatpush.xpose.msra.mxu0 0.0
        %606 = vmatpush.xpose.msra.mxu0 0.0
        %607 = vmatpush.xpose.msra.mxu0 0.0
        %608 = vmatpush.xpose.msra.mxu0 0.0
        %609 = vmatpush.xpose.msra.mxu0 0.0
        %610 = vmatpush.xpose.msra.mxu0 0.0
        %611 = vmatpush.xpose.msra.mxu0 0.0
        %612 = vmatpush.xpose.msra.mxu0 0.0
        %613 = vmatpush.xpose.msra.mxu0 0.0
        %614 = vmatpush.xpose.msra.mxu0 0.0
        %615 = vmatpush.xpose.msra.mxu0 0.0
        %616 = vmatpush.xpose.msra.mxu0 0.0
        %617 = vmatpush.xpose.msra.mxu0 %v600
        %618 = vmatmul.f32.gmra.mxu0 %v600
        %v619 = vpop.f32.mrf.mxu0
        %v620 = vadd.f32 0.0, %v619
        %621 = vdwg.mxu0
        %s622 = scalar_lea.vmem %s415, 16 [#allocation11]
        %623 = vst.msk [vmem:[%s622] sm:$0xff] %vm570, %v620
        %s624 = sand.u32 %s230, 1
        %s625 = scalar_lea.sflag [#allocation4], %s624
        %s626 = sand.u32 %s230, 1
        %s627 = smul.addr %s626, 24
        %s628 = scalar_lea.vmem [#allocation11], %s627
        // Predicated region
        $region77: #{tpu_custom_call.1} parent=55 // pred_check
          %p629 = pneg %p240
        $region78: #{tpu_custom_call.1} parent=55 // pred_check_branch
          %631 = sbr.rel (%p629) target = $region80
        $region79: #{tpu_custom_call.1} parent=55 // pred_region
          %633 = vsyncadd %s625, 0
          %s634 = smul.addr %s28, 3
          %s635 = smul.addr %s634, 8
          %s636 = scalar_lea.hbm %s9, %s635
          %s637 = sshll.u32 %s628, 4
          %s638 = int_to_ptr.vmem [resolvable:$true] %s637
          %s639 = sshll.u32 %s636, 4
          %s640 = int_to_ptr.hbm [resolvable:$true] %s639
          %645 = dma.vmem_to_hbm [thread:$0]  %s638, 384, %s640, %s625, 128, 128, 8
        $region80: #{tpu_custom_call.1} parent=55 // pred_fallthru
          _
      $region56: #{tpu_custom_call.1} parent=5 // pred_fallthru
        _
      %p646 = scmp.le.s32.totalorder 2, %s23
      // Predicated region
      $region81: #{tpu_custom_call.1} parent=5 // pred_check
        %p647 = pneg %p646
      $region82: #{tpu_custom_call.1} parent=5 // pred_check_branch
        %649 = sbr.rel (%p647) target = $region84
      $region83: #{tpu_custom_call.1} parent=5 // pred_region
        %s650 = ssub.s32 %s23, 2
        // Predicated region
        $region85: #{tpu_custom_call.1} parent=83 // pred_check
          %p651 = pneg %p246
        $region86: #{tpu_custom_call.1} parent=83 // pred_check_branch
          %653 = sbr.rel (%p651) target = $region88
        $region87: #{tpu_custom_call.1} parent=83 // pred_region
          %s654 = sand.u32 %s231, 1
          %s655 = scalar_lea.sflag [#allocation4], %s654
          %s656 = sand.u32 %s231, 1
          %s657 = smul.addr %s656, 24
          %s658 = scalar_lea.vmem [#allocation11], %s657
          %660 = dma.done %s655, 384
        $region88: #{tpu_custom_call.1} parent=83 // pred_fallthru
          _
      $region84: #{tpu_custom_call.1} parent=5 // pred_fallthru
        _
    $region6: #{tpu_custom_call.1} parent=1 // loop_footer
      %s27 = sadd.s32 1, %s23
    $region7: #{tpu_custom_call.1} parent=1 // loop_footer_branch
      %22 = sbr.rel target = $region3
    $region8: #{tpu_custom_call.1} parent=1 // loop_exit
      _
    %661 = vsyncpa [#allocation3], 1
    %s662 = scalar_lea.sflag [#allocation3], 1
    %663 = vsyncpa %s662, 1
    %664 = vsyncpa [#allocation6], 1
    %665 = vsyncpa [#allocation9], 1
    %666 = vsyncpa [#allocation4], 1
    %s667 = scalar_lea.sflag [#allocation4], 1
    %668 = vsyncpa %s667, 1

</llo_original>
